<compile_context>
chip_gen: v6e
topology: v6e:2x2x1
jax: 0.10.0
libtpu: 0.0.40
codegen_flags: <defaults>
</compile_context>

<pallas_src>
import functools
import math

import jax
import jax.numpy as jnp
from jax.experimental import pallas as pl
from jax.experimental.pallas import tpu as pltpu

EPS = 1e-5

_MM_TILE_ROWS = 256   # row-block target for the conv (matmul+stats) kernels
_EW_TILE_ROWS = 512   # row-block target for the elementwise kernels (folded rows)


# ----------------------------- small helpers --------------------------------
def _pick_tile(n, target, mult=8):
    """Largest divisor of n that is <= target and a multiple of `mult`.
    Falls back to the full extent (always a legal block)."""
    if n <= target:
        return n
    for d in range(target, 0, -1):
        if n % d == 0 and d % mult == 0:
            return d
    return n


def _fold_factor(rows, chans):
    """Fold m consecutive rows into the lane dim so the last dim becomes a
    multiple of 128 (lane-dense vst/vld). Falls back to 1 if rows don't divide."""
    m = 128 // math.gcd(chans, 128)
    return m if (m > 1 and rows % m == 0) else 1


def _vmem_limit(block_bytes):
    # double-buffered blocks + headroom, clamped to fit v7x's 64 MiB VMEM
    need = 2 * block_bytes + (2 << 20)
    return int(min(max(need, 16 << 20), 64 << 20))


# ------------------------------- kernels -------------------------------------
def _conv_stats_kernel(x_ref, w_ref, y_ref, st_ref):
    """y = x @ w (bf16 operands, f32 accumulate) + per-tile BN partial stats."""
    y = jnp.dot(x_ref[...], w_ref[...], preferred_element_type=jnp.float32)
    y_ref[...] = y
    # one-pass per-channel sum and sum-of-squares while the tile is hot in VMEM
    st_ref[0:1, :] = jnp.sum(y, axis=0, keepdims=True)
    st_ref[1:2, :] = jnp.sum(y * y, axis=0, keepdims=True)


def _bn_relu_kernel(y_ref, a_ref, b_ref, o_ref):
    """h = relu(y * scale + shift); f32 math, bf16 (lane-dense) output."""
    h = jnp.maximum(y_ref[...] * a_ref[...] + b_ref[...], 0.0)
    o_ref[...] = h.astype(o_ref.dtype)


def _bn_add_relu_kernel(y_ref, a_ref, b_ref, s_ref, sa_ref, sb_ref, o_ref):
    """out = relu(y*a + b + s*sa + sb)  (BN2 + shortcut-BN/identity + add + ReLU)."""
    main = y_ref[...] * a_ref[...] + b_ref[...]
    sc = s_ref[...].astype(jnp.float32) * sa_ref[...] + sb_ref[...]
    o_ref[...] = jnp.maximum(main + sc, 0.0)


# ------------------------------ pallas wrappers ------------------------------
def _matmul_stats(x2d, w2d, tile_rows=_MM_TILE_ROWS):
    """(R, K) @ (K, C) -> y (R, C) f32 and per-tile partial stats (T, 2, C)."""
    R, K = x2d.shape
    C = w2d.shape[1]
    TR = _pick_tile(R, tile_rows)
    T = R // TR
    blk_bytes = (TR * K * x2d.dtype.itemsize + K * C * w2d.dtype.itemsize
                 + TR * C * 4 + 2 * C * 4)
    y, stats = pl.pallas_call(
        _conv_stats_kernel,
        out_shape=(jax.ShapeDtypeStruct((R, C), jnp.float32),
                   jax.ShapeDtypeStruct((T, 2, C), jnp.float32)),
        grid_spec=pltpu.PrefetchScalarGridSpec(
            num_scalar_prefetch=0,
            grid=(T,),
            in_specs=[pl.BlockSpec((TR, K), lambda i: (i, 0)),
                      pl.BlockSpec((K, C), lambda i: (0, 0))],
            out_specs=(pl.BlockSpec((TR, C), lambda i: (i, 0)),
                       pl.BlockSpec((None, 2, C), lambda i: (i, 0, 0)))),
        compiler_params=pltpu.CompilerParams(
            dimension_semantics=("parallel",),
            vmem_limit_bytes=_vmem_limit(blk_bytes)),
        cost_estimate=pl.CostEstimate(
            flops=2 * R * K * C,
            transcendentals=0,
            bytes_accessed=(R * K * x2d.dtype.itemsize
                            + K * C * w2d.dtype.itemsize
                            + R * C * 4 + T * 2 * C * 4)),
    )(x2d, w2d)
    return y, stats


def _bn_scale_shift(stats, count, gamma, beta):
    """Reduce per-tile partials -> per-channel affine (training-mode BN)."""
    s = jnp.sum(stats, axis=0)                       # (2, C)
    mean = s[0] / count
    var = jnp.maximum(s[1] / count - mean * mean, 0.0)
    scale = gamma * jax.lax.rsqrt(var + EPS)
    shift = beta - mean * scale
    return scale, shift


def _bn_relu(y, scale, shift, out_dtype=jnp.bfloat16, tile_rows=_EW_TILE_ROWS):
    R, C = y.shape
    m = _fold_factor(R, C)
    rows, Wl = R // m, m * C
    yf = y.reshape(rows, Wl)                         # free reshape, lane-dense
    a = jnp.tile(scale.reshape(1, C).astype(jnp.float32), (1, m))
    b = jnp.tile(shift.reshape(1, C).astype(jnp.float32), (1, m))
    TR = _pick_tile(rows, tile_rows, mult=16)
    blk = TR * Wl * 4 + 2 * Wl * 4 + TR * Wl * jnp.dtype(out_dtype).itemsize
    out = pl.pallas_call(
        _bn_relu_kernel,
        out_shape=jax.ShapeDtypeStruct((rows, Wl), out_dtype),
        grid_spec=pltpu.PrefetchScalarGridSpec(
            num_scalar_prefetch=0,
            grid=(rows // TR,),
            in_specs=[pl.BlockSpec((TR, Wl), lambda i: (i, 0)),
                      pl.BlockSpec((1, Wl), lambda i: (0, 0)),
                      pl.BlockSpec((1, Wl), lambda i: (0, 0))],
            out_specs=pl.BlockSpec((TR, Wl), lambda i: (i, 0))),
        compiler_params=pltpu.CompilerParams(
            dimension_semantics=("parallel",),
            vmem_limit_bytes=_vmem_limit(blk)),
    )(yf, a, b)
    return out.reshape(R, C)


def _bn_add_relu(y, a2, b2, sc, sa, sb, tile_rows=_EW_TILE_ROWS):
    R, C = y.shape
    m = _fold_factor(R, C)
    rows, Wl = R // m, m * C
    TR = _pick_tile(rows, tile_rows)
    blk = 2 * TR * Wl * 4 + 4 * Wl * 4 + TR * Wl * 4
    out = pl.pallas_call(
        _bn_add_relu_kernel,
        out_shape=jax.ShapeDtypeStruct((rows, Wl), jnp.float32),
        grid_spec=pltpu.PrefetchScalarGridSpec(
            num_scalar_prefetch=0,
            grid=(rows // TR,),
            in_specs=[pl.BlockSpec((TR, Wl), lambda i: (i, 0)),
                      pl.BlockSpec((1, Wl), lambda i: (0, 0)),
                      pl.BlockSpec((1, Wl), lambda i: (0, 0)),
                      pl.BlockSpec((TR, Wl), lambda i: (i, 0)),
                      pl.BlockSpec((1, Wl), lambda i: (0, 0)),
                      pl.BlockSpec((1, Wl), lambda i: (0, 0))],
            out_specs=pl.BlockSpec((TR, Wl), lambda i: (i, 0))),
        compiler_params=pltpu.CompilerParams(
            dimension_semantics=("parallel",),
            vmem_limit_bytes=_vmem_limit(blk)),
    )(y.reshape(rows, Wl),
      jnp.tile(a2.reshape(1, C).astype(jnp.float32), (1, m)),
      jnp.tile(b2.reshape(1, C).astype(jnp.float32), (1, m)),
      sc.astype(jnp.float32).reshape(rows, Wl),
      jnp.tile(sa.reshape(1, C).astype(jnp.float32), (1, m)),
      jnp.tile(sb.reshape(1, C).astype(jnp.float32), (1, m)))
    return out.reshape(R, C)


# -------------------------- layout / im2col helpers --------------------------
def _im2col3x3(x_nhwc):
    """(N, H, W, C) -> (N*H*W, 9*C), tap order (kh, kw) then channel."""
    N, H, W, C = x_nhwc.shape
    xp = jnp.pad(x_nhwc, ((0, 0), (1, 1), (1, 1), (0, 0)))
    taps = [xp[:, kh:kh + H, kw:kw + W, :] for kh in range(3) for kw in range(3)]
    return jnp.concatenate(taps, axis=-1).reshape(N * H * W, 9 * C)


def _fuse3x3(w):
    """torch conv weight (Cout, Cin, 3, 3) -> (9*Cin, Cout), matching _im2col3x3."""
    cout, cin = w.shape[0], w.shape[1]
    return jnp.transpose(w, (2, 3, 1, 0)).reshape(9 * cin, cout)


# ------------------------------- forward pass --------------------------------
@functools.partial(jax.jit, static_argnames=("stride",))
def basic_block_forward(x_nchw, params, stride=1):
    """params = (w1, g1, b1, w2, g2, b2[, ws, gs, bs]) in PyTorch layouts."""
    # TODO(synk): stride > 1 (strided conv windows / downsampling) is not implemented in-kernel.
    assert stride == 1, "only stride=1 is supported by this kernel"

    N, Cin, H, W = x_nchw.shape
    w1, g1, b1, w2, g2, b2 = params[:6]
    Cout = w1.shape[0]
    has_proj = (stride != 1) or (Cin != Cout)
    R = N * H * W

    x_nhwc = jnp.transpose(x_nchw, (0, 2, 3, 1)).astype(jnp.float32)

    # conv1: im2col (XLA) + single K=9*Cin matmul (Pallas, bf16 operands) + BN1 stats
    x1 = _im2col3x3(x_nhwc.astype(jnp.bfloat16))                  # (R, 9*Cin) bf16
    y1, st1 = _matmul_stats(x1, _fuse3x3(w1).astype(jnp.bfloat16))
    a1, s1 = _bn_scale_shift(st1, R, g1, b1)

    # BN1 + ReLU (fused elementwise kernel, lane-dense, bf16 out for conv2)
    h1 = _bn_relu(y1, a1, s1, out_dtype=jnp.bfloat16)             # (R, Cout) bf16

    # conv2 + BN2 stats
    x2 = _im2col3x3(h1.reshape(N, H, W, Cout))                    # (R, 9*Cout) bf16
    y2, st2 = _matmul_stats(x2, _fuse3x3(w2).astype(jnp.bfloat16))
    a2, s2 = _bn_scale_shift(st2, R, g2, b2)

    # shortcut: identity, or 1x1 projection conv + its BN stats
    if has_proj:
        ws, gs, bs = params[6:9]
        xs = x_nhwc.reshape(R, Cin).astype(jnp.bfloat16)
        wsf = jnp.transpose(ws[:, :, 0, 0], (1, 0)).astype(jnp.bfloat16)   # (Cin, Cout)
        ys, sts = _matmul_stats(xs, wsf)
        sa, sb = _bn_scale_shift(sts, R, gs, bs)
        sc_pre = ys
    else:
        sc_pre = x_nhwc.reshape(R, Cin)                           # f32 identity
        sa = jnp.ones((Cout,), jnp.float32)
        sb = jnp.zeros((Cout,), jnp.float32)

    # BN2 + shortcut-BN + add + ReLU (fused elementwise kernel)
    out2d = _bn_add_relu(y2, a2, s2, sc_pre, sa, sb)              # (R, Cout) f32
    out_nhwc = out2d.reshape(N, H, W, Cout)
    return jnp.transpose(out_nhwc, (0, 3, 1, 2))                  # back to NCHW


# ------------------------- pure-JAX reference -------------------------------
def ref_forward(x, params, stride=1, operand_dtype=None):
    """f32 reference. If operand_dtype is set, conv operands are rounded through
    that dtype (mirrors the kernel's bf16 MXU operands) for a tight comparison."""
    def cast(a):
        return a.astype(operand_dtype).astype(jnp.float32) if operand_dtype else a

    def conv(xx, w, s, pad):
        return jax.lax.conv_general_dilated(
            cast(xx), cast(w), (s, s), pad,
            dimension_numbers=("NCHW", "OIHW", "NCHW"),
            precision=jax.lax.Precision.HIGHEST)

    def bn(xx, g, b):
        mu = jnp.mean(xx, axis=(0, 2, 3), keepdims=True)
        var = jnp.mean((xx - mu) ** 2, axis=(0, 2, 3), keepdims=True)
        return ((xx - mu) * jax.lax.rsqrt(var + EPS)
                * g.reshape(1, -1, 1, 1) + b.reshape(1, -1, 1, 1))

    w1, g1, b1, w2, g2, b2 = params[:6]
    out = jnp.maximum(bn(conv(x, w1, stride, ((1, 1), (1, 1))), g1, b1), 0.0)
    out = bn(conv(out, w2, 1, ((1, 1), (1, 1))), g2, b2)
    if len(params) > 6:
        ws, gs, bs = params[6:9]
        sc = bn(conv(x, ws, stride, ((0, 0), (0, 0))), gs, bs)
    else:
        sc = x
    return jnp.maximum(out + sc, 0.0)


def _make_params(key, in_planes, planes, stride=1):
    ks = jax.random.split(key, 9)
    w1 = 0.1 * jax.random.normal(ks[0], (planes, in_planes, 3, 3), jnp.float32)
    g1 = 1.0 + 0.1 * jax.random.normal(ks[1], (planes,), jnp.float32)
    b1 = 0.1 * jax.random.normal(ks[2], (planes,), jnp.float32)
    w2 = 0.1 * jax.random.normal(ks[3], (planes, planes, 3, 3), jnp.float32)
    g2 = 1.0 + 0.1 * jax.random.normal(ks[4], (planes,), jnp.float32)
    b2 = 0.1 * jax.random.normal(ks[5], (planes,), jnp.float32)
    params = [w1, g1, b1, w2, g2, b2]
    if stride != 1 or in_planes != planes:
        ws = 0.1 * jax.random.normal(ks[6], (planes, in_planes, 1, 1), jnp.float32)
        gs = 1.0 + 0.1 * jax.random.normal(ks[7], (planes,), jnp.float32)
        bs = 0.1 * jax.random.normal(ks[8], (planes,), jnp.float32)
        params += [ws, gs, bs]
    return tuple(params)


if __name__ == "__main__":
    key = jax.random.PRNGKey(0)
    kx, kp1, kp2 = jax.random.split(key, 3)

    N, Cin, H, W = 2, 4, 16, 16
    x = jax.random.normal(kx, (N, Cin, H, W), jnp.float32)

    def check(params, cout, tag):
        out = basic_block_forward(x, params, stride=1)
        jax.block_until_ready(out)
        assert out.shape == (N, cout, H, W)
        # tight check: reference with the same bf16-rounded conv operands
        err_q = float(jnp.max(jnp.abs(out - ref_forward(x, params, operand_dtype=jnp.bfloat16))))
        # loose check vs the pure f32 reference (bf16 MXU operands => ~1e-2-level error)
        err_f = float(jnp.max(jnp.abs(out - ref_forward(x, params))))
        assert err_q < 1e-2, f"{tag}: kernel vs bf16-operand ref mismatch: {err_q}"
        assert err_f < 1e-1, f"{tag}: kernel vs f32 ref mismatch: {err_f}"

    # Case 1: identity shortcut (in_planes == planes, stride=1)
    check(_make_params(kp1, Cin, Cin, stride=1), Cin, "identity")

    # Case 2: projection shortcut (in_planes != planes, stride=1)
    planes2 = 8
    check(_make_params(kp2, Cin, planes2, stride=1), planes2, "projection")

    print("KERNEL_OK")
</pallas_src>

<mosaic_0001>
module attributes {stable_mosaic.version = 11 : i64} {
  func.func @_conv_stats_kernel(%arg0: i32, %arg1: memref<256x36xbf16, #tpu.memory_space<vmem>>, %arg2: memref<36x4xbf16, #tpu.memory_space<vmem>>, %arg3: memref<256x4xf32, #tpu.memory_space<vmem>>, %arg4: memref<1x2x4xf32, #tpu.memory_space<vmem>>) attributes {dimension_semantics = [#tpu.dimension_semantics<parallel>], iteration_bounds = array<i64: 2>, scalar_prefetch = 0 : i64, scratch_operands = 0 : i64, tpu.core_type = #tpu.core_type<tc>, window_params = [{transform_indices = @transform_0, window_bounds = array<i64: 256, 36>}, {pipeline_mode = #tpu.pipeline_mode<synchronous>, transform_indices = @transform_1, window_bounds = array<i64: 36, 4>}, {transform_indices = @transform_2, window_bounds = array<i64: 256, 4>}, {transform_indices = @transform_3, window_bounds = array<i64: 1, 2, 4>}]} {
    %c0 = arith.constant 0 : index
    %c0_0 = arith.constant 0 : index
    %0 = vector.load %arg1[%c0, %c0_0] : memref<256x36xbf16, #tpu.memory_space<vmem>>, vector<256x36xbf16>
    %c0_1 = arith.constant 0 : index
    %c0_2 = arith.constant 0 : index
    %1 = vector.load %arg2[%c0_1, %c0_2] : memref<36x4xbf16, #tpu.memory_space<vmem>>, vector<36x4xbf16>
    %cst = arith.constant dense<0.000000e+00> : vector<256x4xf32>
    %2 = tpu.matmul %0, %1, %cst {dimension_numbers = #tpu.dot_dimension_numbers<[1], [0], [0], [1], [0, 0, 1, 1], [], []>} : vector<256x36xbf16>, vector<36x4xbf16>, vector<256x4xf32> -> vector<256x4xf32>
    %c0_3 = arith.constant 0 : index
    %c0_4 = arith.constant 0 : index
    %3 = vector.load %arg3[%c0_3, %c0_4] : memref<256x4xf32, #tpu.memory_space<vmem>>, vector<256x4xf32>
    tpu.vector_store %arg3[%c0_3, %c0_4], %2 {strides = array<i32>} : memref<256x4xf32, #tpu.memory_space<vmem>>, vector<256x4xf32>,
    %cst_5 = arith.constant dense<0.000000e+00> : vector<4xf32>
    %4 = vector.multi_reduction <add>, %2, %cst_5 [0] : vector<256x4xf32> to vector<4xf32>
    %5 = vector.shape_cast %4 : vector<4xf32> to vector<1x4xf32>
    %c0_6 = arith.constant 0 : index
    %c0_7 = arith.constant 0 : index
    %c0_8 = arith.constant 0 : index
    %6 = vector.load %arg4[%c0_6, %c0_7, %c0_8] : memref<1x2x4xf32, #tpu.memory_space<vmem>>, vector<1x1x4xf32>
    %7 = vector.shape_cast %6 : vector<1x1x4xf32> to vector<1x4xf32>
    %8 = vector.shape_cast %5 : vector<1x4xf32> to vector<1x1x4xf32>
    tpu.vector_store %arg4[%c0_6, %c0_7, %c0_8], %8 {strides = array<i32>} : memref<1x2x4xf32, #tpu.memory_space<vmem>>, vector<1x1x4xf32>,
    %9 = arith.mulf %2, %2 : vector<256x4xf32>
    %cst_9 = arith.constant dense<0.000000e+00> : vector<4xf32>
    %10 = vector.multi_reduction <add>, %9, %cst_9 [0] : vector<256x4xf32> to vector<4xf32>
    %11 = vector.shape_cast %10 : vector<4xf32> to vector<1x4xf32>
    %c0_10 = arith.constant 0 : index
    %c1 = arith.constant 1 : index
    %c0_11 = arith.constant 0 : index
    %12 = vector.load %arg4[%c0_10, %c1, %c0_11] : memref<1x2x4xf32, #tpu.memory_space<vmem>>, vector<1x1x4xf32>
    %13 = vector.shape_cast %12 : vector<1x1x4xf32> to vector<1x4xf32>
    %14 = vector.shape_cast %11 : vector<1x4xf32> to vector<1x1x4xf32>
    tpu.vector_store %arg4[%c0_10, %c1, %c0_11], %14 {strides = array<i32>} : memref<1x2x4xf32, #tpu.memory_space<vmem>>, vector<1x1x4xf32>,
    return
  }
  func.func @transform_0(%arg0: i32) -> (i32, i32) {
    %c0_i32 = arith.constant 0 : i32
    %c0_i32_0 = arith.constant 0 : i32
    return %arg0, %c0_i32 : i32, i32
  }
  func.func @transform_1(%arg0: i32) -> (i32, i32) {
    %c0_i32 = arith.constant 0 : i32
    %c0_i32_0 = arith.constant 0 : i32
    %c0_i32_1 = arith.constant 0 : i32
    return %c0_i32, %c0_i32_0 : i32, i32
  }
  func.func @transform_2(%arg0: i32) -> (i32, i32) {
    %c0_i32 = arith.constant 0 : i32
    %c0_i32_0 = arith.constant 0 : i32
    return %arg0, %c0_i32 : i32, i32
  }
  func.func @transform_3(%arg0: i32) -> (i32, i32, i32) {
    %c0_i32 = arith.constant 0 : i32
    %c0_i32_0 = arith.constant 0 : i32
    %c0_i32_1 = arith.constant 0 : i32
    return %arg0, %c0_i32, %c0_i32_0 : i32, i32, i32
  }
}

module attributes {stable_mosaic.version = 11 : i64} {
  func.func @_bn_relu_kernel(%arg0: i32, %arg1: memref<16x128xf32, #tpu.memory_space<vmem>>, %arg2: memref<1x128xf32, #tpu.memory_space<vmem>>, %arg3: memref<1x128xf32, #tpu.memory_space<vmem>>, %arg4: memref<16x128xbf16, #tpu.memory_space<vmem>>) attributes {dimension_semantics = [#tpu.dimension_semantics<parallel>], iteration_bounds = array<i64: 1>, scalar_prefetch = 0 : i64, scratch_operands = 0 : i64, tpu.core_type = #tpu.core_type<tc>, window_params = [{transform_indices = @transform_0, window_bounds = array<i64: 16, 128>}, {pipeline_mode = #tpu.pipeline_mode<synchronous>, transform_indices = @transform_1, window_bounds = array<i64: 1, 128>}, {pipeline_mode = #tpu.pipeline_mode<synchronous>, transform_indices = @transform_2, window_bounds = array<i64: 1, 128>}, {transform_indices = @transform_3, window_bounds = array<i64: 16, 128>}]} {
    %c0 = arith.constant 0 : index
    %c0_0 = arith.constant 0 : index
    %0 = vector.load %arg1[%c0, %c0_0] : memref<16x128xf32, #tpu.memory_space<vmem>>, vector<16x128xf32>
    %c0_1 = arith.constant 0 : index
    %c0_2 = arith.constant 0 : index
    %1 = vector.load %arg2[%c0_1, %c0_2] : memref<1x128xf32, #tpu.memory_space<vmem>>, vector<1x128xf32>
    %2 = vector.broadcast %1 : vector<1x128xf32> to vector<16x128xf32>
    %3 = arith.mulf %0, %2 : vector<16x128xf32>
    %c0_3 = arith.constant 0 : index
    %c0_4 = arith.constant 0 : index
    %4 = vector.load %arg3[%c0_3, %c0_4] : memref<1x128xf32, #tpu.memory_space<vmem>>, vector<1x128xf32>
    %5 = vector.broadcast %4 : vector<1x128xf32> to vector<16x128xf32>
    %6 = arith.addf %3, %5 : vector<16x128xf32>
    %cst = arith.constant 0.000000e+00 : f32
    %7 = vector.broadcast %cst : f32 to vector<16x128xf32>
    %8 = arith.maximumf %6, %7 : vector<16x128xf32>
    %9 = arith.truncf %8 : vector<16x128xf32> to vector<16x128xbf16>
    %c0_5 = arith.constant 0 : index
    %c0_6 = arith.constant 0 : index
    %10 = vector.load %arg4[%c0_5, %c0_6] : memref<16x128xbf16, #tpu.memory_space<vmem>>, vector<16x128xbf16>
    tpu.vector_store %arg4[%c0_5, %c0_6], %9 {strides = array<i32>} : memref<16x128xbf16, #tpu.memory_space<vmem>>, vector<16x128xbf16>,
    return
  }
  func.func @transform_0(%arg0: i32) -> (i32, i32) {
    %c0_i32 = arith.constant 0 : i32
    %c0_i32_0 = arith.constant 0 : i32
    return %arg0, %c0_i32 : i32, i32
  }
  func.func @transform_1(%arg0: i32) -> (i32, i32) {
    %c0_i32 = arith.constant 0 : i32
    %c0_i32_0 = arith.constant 0 : i32
    %c0_i32_1 = arith.constant 0 : i32
    return %c0_i32, %c0_i32_0 : i32, i32
  }
  func.func @transform_2(%arg0: i32) -> (i32, i32) {
    %c0_i32 = arith.constant 0 : i32
    %c0_i32_0 = arith.constant 0 : i32
    %c0_i32_1 = arith.constant 0 : i32
    return %c0_i32, %c0_i32_0 : i32, i32
  }
  func.func @transform_3(%arg0: i32) -> (i32, i32) {
    %c0_i32 = arith.constant 0 : i32
    %c0_i32_0 = arith.constant 0 : i32
    return %arg0, %c0_i32 : i32, i32
  }
}

module attributes {stable_mosaic.version = 11 : i64} {
  func.func @_bn_add_relu_kernel(%arg0: i32, %arg1: memref<16x128xf32, #tpu.memory_space<vmem>>, %arg2: memref<1x128xf32, #tpu.memory_space<vmem>>, %arg3: memref<1x128xf32, #tpu.memory_space<vmem>>, %arg4: memref<16x128xf32, #tpu.memory_space<vmem>>, %arg5: memref<1x128xf32, #tpu.memory_space<vmem>>, %arg6: memref<1x128xf32, #tpu.memory_space<vmem>>, %arg7: memref<16x128xf32, #tpu.memory_space<vmem>>) attributes {dimension_semantics = [#tpu.dimension_semantics<parallel>], iteration_bounds = array<i64: 1>, scalar_prefetch = 0 : i64, scratch_operands = 0 : i64, tpu.core_type = #tpu.core_type<tc>, window_params = [{transform_indices = @transform_0, window_bounds = array<i64: 16, 128>}, {pipeline_mode = #tpu.pipeline_mode<synchronous>, transform_indices = @transform_1, window_bounds = array<i64: 1, 128>}, {pipeline_mode = #tpu.pipeline_mode<synchronous>, transform_indices = @transform_2, window_bounds = array<i64: 1, 128>}, {transform_indices = @transform_3, window_bounds = array<i64: 16, 128>}, {pipeline_mode = #tpu.pipeline_mode<synchronous>, transform_indices = @transform_4, window_bounds = array<i64: 1, 128>}, {pipeline_mode = #tpu.pipeline_mode<synchronous>, transform_indices = @transform_5, window_bounds = array<i64: 1, 128>}, {transform_indices = @transform_6, window_bounds = array<i64: 16, 128>}]} {
    %c0 = arith.constant 0 : index
    %c0_0 = arith.constant 0 : index
    %0 = vector.load %arg1[%c0, %c0_0] : memref<16x128xf32, #tpu.memory_space<vmem>>, vector<16x128xf32>
    %c0_1 = arith.constant 0 : index
    %c0_2 = arith.constant 0 : index
    %1 = vector.load %arg2[%c0_1, %c0_2] : memref<1x128xf32, #tpu.memory_space<vmem>>, vector<1x128xf32>
    %2 = vector.broadcast %1 : vector<1x128xf32> to vector<16x128xf32>
    %3 = arith.mulf %0, %2 : vector<16x128xf32>
    %c0_3 = arith.constant 0 : index
    %c0_4 = arith.constant 0 : index
    %4 = vector.load %arg3[%c0_3, %c0_4] : memref<1x128xf32, #tpu.memory_space<vmem>>, vector<1x128xf32>
    %5 = vector.broadcast %4 : vector<1x128xf32> to vector<16x128xf32>
    %6 = arith.addf %3, %5 : vector<16x128xf32>
    %c0_5 = arith.constant 0 : index
    %c0_6 = arith.constant 0 : index
    %7 = vector.load %arg4[%c0_5, %c0_6] : memref<16x128xf32, #tpu.memory_space<vmem>>, vector<16x128xf32>
    %c0_7 = arith.constant 0 : index
    %c0_8 = arith.constant 0 : index
    %8 = vector.load %arg5[%c0_7, %c0_8] : memref<1x128xf32, #tpu.memory_space<vmem>>, vector<1x128xf32>
    %9 = vector.broadcast %8 : vector<1x128xf32> to vector<16x128xf32>
    %10 = arith.mulf %7, %9 : vector<16x128xf32>
    %c0_9 = arith.constant 0 : index
    %c0_10 = arith.constant 0 : index
    %11 = vector.load %arg6[%c0_9, %c0_10] : memref<1x128xf32, #tpu.memory_space<vmem>>, vector<1x128xf32>
    %12 = vector.broadcast %11 : vector<1x128xf32> to vector<16x128xf32>
    %13 = arith.addf %10, %12 : vector<16x128xf32>
    %14 = arith.addf %6, %13 : vector<16x128xf32>
    %cst = arith.constant 0.000000e+00 : f32
    %15 = vector.broadcast %cst : f32 to vector<16x128xf32>
    %16 = arith.maximumf %14, %15 : vector<16x128xf32>
    %c0_11 = arith.constant 0 : index
    %c0_12 = arith.constant 0 : index
    %17 = vector.load %arg7[%c0_11, %c0_12] : memref<16x128xf32, #tpu.memory_space<vmem>>, vector<16x128xf32>
    tpu.vector_store %arg7[%c0_11, %c0_12], %16 {strides = array<i32>} : memref<16x128xf32, #tpu.memory_space<vmem>>, vector<16x128xf32>,
    return
  }
  func.func @transform_0(%arg0: i32) -> (i32, i32) {
    %c0_i32 = arith.constant 0 : i32
    %c0_i32_0 = arith.constant 0 : i32
    return %arg0, %c0_i32 : i32, i32
  }
  func.func @transform_1(%arg0: i32) -> (i32, i32) {
    %c0_i32 = arith.constant 0 : i32
    %c0_i32_0 = arith.constant 0 : i32
    %c0_i32_1 = arith.constant 0 : i32
    return %c0_i32, %c0_i32_0 : i32, i32
  }
  func.func @transform_2(%arg0: i32) -> (i32, i32) {
    %c0_i32 = arith.constant 0 : i32
    %c0_i32_0 = arith.constant 0 : i32
    %c0_i32_1 = arith.constant 0 : i32
    return %c0_i32, %c0_i32_0 : i32, i32
  }
  func.func @transform_3(%arg0: i32) -> (i32, i32) {
    %c0_i32 = arith.constant 0 : i32
    %c0_i32_0 = arith.constant 0 : i32
    return %arg0, %c0_i32 : i32, i32
  }
  func.func @transform_4(%arg0: i32) -> (i32, i32) {
    %c0_i32 = arith.constant 0 : i32
    %c0_i32_0 = arith.constant 0 : i32
    %c0_i32_1 = arith.constant 0 : i32
    return %c0_i32, %c0_i32_0 : i32, i32
  }
  func.func @transform_5(%arg0: i32) -> (i32, i32) {
    %c0_i32 = arith.constant 0 : i32
    %c0_i32_0 = arith.constant 0 : i32
    %c0_i32_1 = arith.constant 0 : i32
    return %c0_i32, %c0_i32_0 : i32, i32
  }
  func.func @transform_6(%arg0: i32) -> (i32, i32) {
    %c0_i32 = arith.constant 0 : i32
    %c0_i32_0 = arith.constant 0 : i32
    return %arg0, %c0_i32 : i32, i32
  }
}

</mosaic_0001>

<llo_original>
// kernel: basic_block_forward.4
$region0: #{basic_block_forward.4}
  #allocation0 [shape = 'u32[]', space=smem, size = 0x4, offset = 0x4, fixed_abs, tag = 'smem constant byte address 0x4 - core index']
  #allocation1 [shape = 'u32[144,128]{1,0:T(1,128)}', space=vmem, size = 0x12000, scoped, tag = 'internal scratch']
  %s0 = inlined_call_operand.vmem [shape: bf16[512,36], index: 0, kind: input, shape index: {}]
  %s1 = inlined_call_operand.vmem [shape: bf16[36,4], index: 1, kind: input, shape index: {}]
  %s2 = inlined_call_operand.vmem [shape: f32[512,4], index: 2, kind: output, shape index: {0}]
  %s3 = inlined_call_operand.vmem [shape: f32[2,2,4], index: 3, kind: output, shape index: {1}]
  %4 = xla_tuple %s2, %s3
  %s5 = sld [smem:[#allocation0]]
  $region49: #{basic_block_forward.4} parent=0
    _
  %s7 = ssub.s32 1, %s5
  %s8 = scalar_select 0, %s7, %s5
  loop: start=0, step=1, limit=4
  $region2: #{basic_block_forward.4} parent=0 // loop_pre_header
    _
  $region3: #{basic_block_forward.4} parent=0 // loop_header
    %s10 = sphi 0, %s14
    %p11 = scmp.ge.s32.totalorder %s10, 4
    %s20 = sphi 0, %s22
    %s23 = sphi 0, %s20
    %s24 = sphi 0, %s23
    %s40 = sphi 0, %s24
    %s44 = sphi 0, %s44
    %s46 = sphi 0, %s44
    %s47 = sphi 0, %s46
    %s61 = sphi 0, %s47
    %s67 = sphi 0, %s69
    %s70 = sphi 0, %s67
    %s71 = sphi 0, %s70
    %s87 = sphi 0, %s71
    %s93 = sphi 0, %s95
    %s96 = sphi 0, %s93
    %s97 = sphi 0, %s96
    %s113 = sphi 0, %s97
  $region4: #{basic_block_forward.4} parent=0 // loop_header_branch
    %13 = sbr.rel (%p11) target = $region8
  $region5: #{basic_block_forward.4} parent=0 // loop_body
    %s15 = ssub.s32 %s10, 1
    %s16 = ssub.s32 %s10, 2
    %s17 = sadd.s32 %s10, 1
    %s18 = ssub.s32 %s10, %s17
    %p19 = scmp.eq.s32.totalorder %s18, 0
    %s21 = sadd.s32 %s20, 1
    %s22 = scalar_select %p19, %s20, %s21
    %p25 = pneg %p19
    %p26 = scmp.eq.s32.totalorder %s10, 1
    %p27 = por %p25, %p26
    %p28 = scmp.ne.s32.totalorder %s20, %s23
    %p29 = scmp.eq.s32.totalorder %s10, 0
    %p30 = por %p28, %p29
    %p31 = scmp.ne.s32.totalorder %s20, %s23
    %p32 = scmp.eq.s32.totalorder %s15, 1
    %p33 = por %p31, %p32
    %p34 = scmp.ne.s32.totalorder %s23, %s24
    %p35 = scmp.eq.s32.totalorder %s15, 0
    %p36 = por %p34, %p35
    %p37 = scmp.ne.s32.totalorder %s23, %s24
    %p38 = scmp.eq.s32.totalorder %s16, 1
    %p39 = por %p37, %p38
    %p41 = scmp.ne.s32.totalorder %s24, %s40
    %p42 = scmp.eq.s32.totalorder %s16, 0
    %p43 = por %p41, %p42
    %s45 = sadd.s32 %s44, 1
    %p48 = scmp.eq.s32.totalorder %s10, 1
    %p49 = scmp.ne.s32.totalorder %s44, %s46
    %p50 = scmp.eq.s32.totalorder %s10, 0
    %p51 = por %p49, %p50
    %p52 = scmp.ne.s32.totalorder %s44, %s46
    %p53 = scmp.eq.s32.totalorder %s15, 1
    %p54 = por %p52, %p53
    %p55 = scmp.ne.s32.totalorder %s46, %s47
    %p56 = scmp.eq.s32.totalorder %s15, 0
    %p57 = por %p55, %p56
    %p58 = scmp.ne.s32.totalorder %s46, %s47
    %p59 = scmp.eq.s32.totalorder %s16, 1
    %p60 = por %p58, %p59
    %p62 = scmp.ne.s32.totalorder %s47, %s61
    %p63 = scmp.eq.s32.totalorder %s16, 0
    %p64 = por %p62, %p63
    %s65 = ssub.s32 %s10, %s17
    %p66 = scmp.eq.s32.totalorder %s65, 0
    %s68 = sadd.s32 %s67, 1
    %s69 = scalar_select %p66, %s67, %s68
    %p72 = pneg %p66
    %p73 = scmp.eq.s32.totalorder %s10, 1
    %p74 = por %p72, %p73
    %p75 = scmp.ne.s32.totalorder %s67, %s70
    %p76 = scmp.eq.s32.totalorder %s10, 0
    %p77 = por %p75, %p76
    %p78 = scmp.ne.s32.totalorder %s67, %s70
    %p79 = scmp.eq.s32.totalorder %s15, 1
    %p80 = por %p78, %p79
    %p81 = scmp.ne.s32.totalorder %s70, %s71
    %p82 = scmp.eq.s32.totalorder %s15, 0
    %p83 = por %p81, %p82
    %p84 = scmp.ne.s32.totalorder %s70, %s71
    %p85 = scmp.eq.s32.totalorder %s16, 1
    %p86 = por %p84, %p85
    %p88 = scmp.ne.s32.totalorder %s71, %s87
    %p89 = scmp.eq.s32.totalorder %s16, 0
    %p90 = por %p88, %p89
    %s91 = ssub.s32 %s10, %s17
    %p92 = scmp.eq.s32.totalorder %s91, 0
    %s94 = sadd.s32 %s93, 1
    %s95 = scalar_select %p92, %s93, %s94
    %p98 = pneg %p92
    %p99 = scmp.eq.s32.totalorder %s10, 1
    %p100 = por %p98, %p99
    %p101 = scmp.ne.s32.totalorder %s93, %s96
    %p102 = scmp.eq.s32.totalorder %s10, 0
    %p103 = por %p101, %p102
    %p104 = scmp.ne.s32.totalorder %s93, %s96
    %p105 = scmp.eq.s32.totalorder %s15, 1
    %p106 = por %p104, %p105
    %p107 = scmp.ne.s32.totalorder %s96, %s97
    %p108 = scmp.eq.s32.totalorder %s15, 0
    %p109 = por %p107, %p108
    %p110 = scmp.ne.s32.totalorder %s96, %s97
    %p111 = scmp.eq.s32.totalorder %s16, 1
    %p112 = por %p110, %p111
    %p114 = scmp.ne.s32.totalorder %s97, %s113
    %p115 = scmp.eq.s32.totalorder %s16, 0
    %p116 = por %p114, %p115
    %p117 = scmp.le.s32.totalorder 1, %s10
    %p118 = scmp.lt.s32.totalorder %s10, 3
    %p119 = pnand %p117, %p118
    %p120 = pneg %p119
    // Predicated region
    $region9: #{basic_block_forward.4} parent=5 // pred_check
      _
    $region10: #{basic_block_forward.4} parent=5 // pred_check_branch
      %122 = sbr.rel (%p119) target = $region12
    $region11: #{basic_block_forward.4} parent=5 // pred_region
      %s123 = ssub.s32 %s10, 1
      // Predicated region
      $region13: #{basic_block_forward.4} parent=11 // pred_check
        %p124 = pneg %p57
      $region14: #{basic_block_forward.4} parent=11 // pred_check_branch
        %126 = sbr.rel (%p124) target = $region16
      $region15: #{basic_block_forward.4} parent=11 // pred_region
        _
      $region16: #{basic_block_forward.4} parent=11 // pred_fallthru
        _
    $region12: #{basic_block_forward.4} parent=5 // pred_fallthru
      _
    %p127 = scmp.lt.s32.totalorder %s10, 2
    // Predicated region
    $region17: #{basic_block_forward.4} parent=5 // pred_check
      %p128 = pneg %p127
    $region18: #{basic_block_forward.4} parent=5 // pred_check_branch
      %130 = sbr.rel (%p128) target = $region20
    $region19: #{basic_block_forward.4} parent=5 // pred_region
      // Predicated region
      $region21: #{basic_block_forward.4} parent=19 // pred_check
        %p131 = pneg %p30
      $region22: #{basic_block_forward.4} parent=19 // pred_check_branch
        %133 = sbr.rel (%p131) target = $region24
      $region23: #{basic_block_forward.4} parent=19 // pred_region
        %s134 = smul.u32 32, %s10
        %p135 = scmp.lt.s32.totalorder %s134, 63
        %s136 = scalar_select %p135, %s134, 63
        %s137 = smul.addr %s136, 4
        %s138 = scalar_lea.vmem %s0, %s137
        %s139 = smul.u32 32, %s10
      $region24: #{basic_block_forward.4} parent=19 // pred_fallthru
        _
    $region20: #{basic_block_forward.4} parent=5 // pred_fallthru
      _
    %p140 = scmp.le.s32.totalorder 1, %s10
    %p141 = scmp.lt.s32.totalorder %s10, 3
    %p142 = pnand %p140, %p141
    %p143 = pneg %p142
    // Predicated region
    $region25: #{basic_block_forward.4} parent=5 // pred_check
      _
    $region26: #{basic_block_forward.4} parent=5 // pred_check_branch
      %145 = sbr.rel (%p142) target = $region28
    $region27: #{basic_block_forward.4} parent=5 // pred_region
      %s146 = ssub.s32 %s10, 1
      %s147 = smul.u32 32, %s15
      %p148 = scmp.lt.s32.totalorder %s147, 63
      %s149 = scalar_select %p148, %s147, 63
      %s150 = smul.addr %s149, 4
      %s151 = scalar_lea.vmem %s0, %s150
      %p152 = pneg %p36
      %p153 = pneg %p33
      %p154 = pneg %p57
      %p155 = pneg %p54
      %p156 = pneg %p83
      %p157 = pneg %p80
      %s158 = smul.u32 32, %s15
      %p159 = scmp.lt.s32.totalorder %s158, 63
      %s160 = scalar_select %p159, %s158, 63
      %s161 = smul.addr %s160, 8
      %s162 = scalar_lea.vmem %s2, %s161
      %p163 = pneg %p109
      %p164 = pneg %p106
      %p165 = scmp.lt.s32.totalorder %s15, 1
      %s166 = scalar_select %p165, %s15, 1
      %s167 = smul.addr %s166, 2
      %s168 = scalar_lea.vmem %s3, %s167
      %s169 = smul.u32 32, %s15
      %p170 = scmp.lt.s32.totalorder %s169, 63
      %s171 = scalar_select %p170, %s169, 63
      %s172 = smul.addr %s171, 4
      %s173 = scalar_lea.vmem %s0, %s172
      %s174 = smul.u32 32, %s15
      %s175 = smul.u32 32, %s15
      %p176 = scmp.lt.s32.totalorder %s175, 63
      %s177 = scalar_select %p176, %s175, 63
      %s178 = smul.addr %s177, 8
      %s179 = scalar_lea.vmem %s2, %s178
      %s180 = smul.u32 32, %s15
      %p181 = scmp.lt.s32.totalorder %s15, 1
      %s182 = scalar_select %p181, %s15, 1
      %s183 = smul.addr %s182, 2
      %s184 = scalar_lea.vmem %s3, %s183
      %v186 = vld [vmem:[%s173] sm:$0xf]
      %v187 = vld [vmem:[%s173 + $0x4] sm:$0xf]
      %v188 = vld [vmem:[%s173 + $0x8] sm:$0xf]
      %v189 = vld [vmem:[%s173 + $0xc] sm:$0xf]
      %v190 = vld [vmem:[%s173 + $0x10] sm:$0xf]
      %v191 = vld [vmem:[%s173 + $0x14] sm:$0xf]
      %v192 = vld [vmem:[%s173 + $0x18] sm:$0xf]
      %v193 = vld [vmem:[%s173 + $0x1c] sm:$0xf]
      %v194 = vld [vmem:[%s173 + $0x20] sm:$0xf]
      %v195 = vld [vmem:[%s173 + $0x24] sm:$0xf]
      %v196 = vld [vmem:[%s173 + $0x28] sm:$0xf]
      %v197 = vld [vmem:[%s173 + $0x2c] sm:$0xf]
      %v198 = vld [vmem:[%s173 + $0x30] sm:$0xf]
      %v199 = vld [vmem:[%s173 + $0x34] sm:$0xf]
      %v200 = vld [vmem:[%s173 + $0x38] sm:$0xf]
      %v201 = vld [vmem:[%s173 + $0x3c] sm:$0xf]
      %v202 = vld [vmem:[%s173 + $0x40] sm:$0xf]
      %v203 = vld [vmem:[%s173 + $0x44] sm:$0xf]
      %v204 = vld [vmem:[%s173 + $0x48] sm:$0xf]
      %v205 = vld [vmem:[%s173 + $0x4c] sm:$0xf]
      %v206 = vld [vmem:[%s173 + $0x50] sm:$0xf]
      %v207 = vld [vmem:[%s173 + $0x54] sm:$0xf]
      %v208 = vld [vmem:[%s173 + $0x58] sm:$0xf]
      %v209 = vld [vmem:[%s173 + $0x5c] sm:$0xf]
      %v210 = vld [vmem:[%s173 + $0x60] sm:$0xf]
      %v211 = vld [vmem:[%s173 + $0x64] sm:$0xf]
      %v212 = vld [vmem:[%s173 + $0x68] sm:$0xf]
      %v213 = vld [vmem:[%s173 + $0x6c] sm:$0xf]
      %v214 = vld [vmem:[%s173 + $0x70] sm:$0xf]
      %v215 = vld [vmem:[%s173 + $0x74] sm:$0xf]
      %v216 = vld [vmem:[%s173 + $0x78] sm:$0xf]
      %v217 = vld [vmem:[%s173 + $0x7c] sm:$0xf]
      %v218 = vld [vmem:[%s1] sm:$0xf]
      %v219 = vld [vmem:[%s1 + $0x4] sm:$0xf]
      %v220 = vld [vmem:[%s1 + $0x8] sm:$0xf]
      %v221 = vld [vmem:[%s1 + $0xc] sm:$0xf]
      %v222 = vld [vmem:[%s1 + $0x10] sm:$0x3]
      %v255 = vunpack.c.l.b16 %v186
      %v256 = vunpack.c.l.b16 %v187
      %v257 = vunpack.c.l.b16 %v188
      %v258 = vunpack.c.l.b16 %v189
      %v259 = vunpack.c.l.b16 %v190
      %v260 = vunpack.c.l.b16 %v191
      %v261 = vunpack.c.l.b16 %v192
      %v262 = vunpack.c.l.b16 %v193
      %v263 = vunpack.c.l.b16 %v194
      %v264 = vunpack.c.l.b16 %v195
      %v265 = vunpack.c.l.b16 %v196
      %v266 = vunpack.c.l.b16 %v197
      %v267 = vunpack.c.l.b16 %v198
      %v268 = vunpack.c.l.b16 %v199
      %v269 = vunpack.c.l.b16 %v200
      %v270 = vunpack.c.l.b16 %v201
      %v271 = vunpack.c.l.b16 %v202
      %v272 = vunpack.c.l.b16 %v203
      %v273 = vunpack.c.l.b16 %v204
      %v274 = vunpack.c.l.b16 %v205
      %v275 = vunpack.c.l.b16 %v206
      %v276 = vunpack.c.l.b16 %v207
      %v277 = vunpack.c.l.b16 %v208
      %v278 = vunpack.c.l.b16 %v209
      %v279 = vunpack.c.l.b16 %v210
      %v280 = vunpack.c.l.b16 %v211
      %v281 = vunpack.c.l.b16 %v212
      %v282 = vunpack.c.l.b16 %v213
      %v283 = vunpack.c.l.b16 %v214
      %v284 = vunpack.c.l.b16 %v215
      %v285 = vunpack.c.l.b16 %v216
      %v286 = vunpack.c.l.b16 %v217
      %v287 = vpack.c.b16 %v256, %v255
      %v288 = vpack.c.b16 %v258, %v257
      %v289 = vpack.c.b16 %v260, %v259
      %v290 = vpack.c.b16 %v262, %v261
      %v291 = vpack.c.b16 %v264, %v263
      %v292 = vpack.c.b16 %v266, %v265
      %v293 = vpack.c.b16 %v268, %v267
      %v294 = vpack.c.b16 %v270, %v269
      %v295 = vpack.c.b16 %v272, %v271
      %v296 = vpack.c.b16 %v274, %v273
      %v297 = vpack.c.b16 %v276, %v275
      %v298 = vpack.c.b16 %v278, %v277
      %v299 = vpack.c.b16 %v280, %v279
      %v300 = vpack.c.b16 %v282, %v281
      %v301 = vpack.c.b16 %v284, %v283
      %v302 = vpack.c.b16 %v286, %v285
      %v308 = vunpack.c.l.b16 %v218
      %v309 = vunpack.c.l.b16 %v219
      %v310 = vunpack.c.l.b16 %v220
      %v311 = vunpack.c.l.b16 %v221
      %v312 = vunpack.c.l.b16 %v222
      %v313 = vpack.c.b16 %v309, %v308
      %v314 = vpack.c.b16 %v311, %v310
      %v315 = vpack.c.b16 %v312, %v312
      %vm318 = vcmask 293888
      %v320 = vsel %vm318, %v287, 0
      %v323 = vsel %vm318, %v288, 0
      %v326 = vsel %vm318, %v289, 0
      %v329 = vsel %vm318, %v290, 0
      %v332 = vsel %vm318, %v291, 0
      %v335 = vsel %vm318, %v292, 0
      %v338 = vsel %vm318, %v293, 0
      %v341 = vsel %vm318, %v294, 0
      %v344 = vsel %vm318, %v295, 0
      %v347 = vsel %vm318, %v296, 0
      %v350 = vsel %vm318, %v297, 0
      %v353 = vsel %vm318, %v298, 0
      %v356 = vsel %vm318, %v299, 0
      %v359 = vsel %vm318, %v300, 0
      %v362 = vsel %vm318, %v301, 0
      %v365 = vsel %vm318, %v302, 0
      %vm367 = vcmask 1041408
      %v369 = vsel %vm367, %v315, 0
      %371 = vmatprep.subr.bf16.mxu0 0
      %372 = vmatpush1.bf16.msra.mxu0 0
      %373 = vmatprep.subr.bf16.mxu0 0
      %374 = vmatpush1.bf16.msra.mxu0 0
      %375 = vmatprep.subr.bf16.mxu0 0
      %376 = vmatpush1.bf16.msra.mxu0 0
      %377 = vmatprep.subr.bf16.mxu0 0
      %378 = vmatpush1.bf16.msra.mxu0 0
      %379 = vmatprep.subr.bf16.mxu0 0
      %380 = vmatpush1.bf16.msra.mxu0 0
      %381 = vmatprep.subr.bf16.mxu0 0
      %382 = vmatpush1.bf16.msra.mxu0 %v369
      %383 = vmatprep.subr.bf16.mxu0 0
      %384 = vmatpush1.bf16.msra.mxu0 %v314
      %385 = vmatprep.subr.bf16.mxu0 0
      %386 = vmatpush1.bf16.msra.mxu0 %v313
      %387 = vmatprep.subr.bf16.mxu0 0
      %388 = vmatpush2.bf16.msra.mxu0 0
      %389 = vmatprep.subr.bf16.mxu0 0
      %390 = vmatpush2.bf16.msra.mxu0 0
      %391 = vmatprep.subr.bf16.mxu0 0
      %392 = vmatpush2.bf16.msra.mxu0 0
      %393 = vmatprep.subr.bf16.mxu0 0
      %394 = vmatpush2.bf16.msra.mxu0 0
      %395 = vmatprep.subr.bf16.mxu0 0
      %396 = vmatpush2.bf16.msra.mxu0 0
      %397 = vmatprep.subr.bf16.mxu0 0
      %398 = vmatpush2.bf16.msra.mxu0 0
      %399 = vmatprep.subr.bf16.mxu0 0
      %400 = vmatpush2.bf16.msra.mxu0 0
      %401 = vmatprep.subr.bf16.mxu0 0
      %402 = vmatpush2.bf16.msra.mxu0 0
      %403 = vmatprep.mubr.bf16.mxu0 0
      %404 = vmatmul.mubr.bf16.gmra.mxu0 %v320
      %v405 = vpop.f32.mrf.mxu0
      %v406 = vadd.f32 0.0, %v405
      %v407 = vpop.f32.mrf.mxu0
      %v408 = vpop.f32.mrf.mxu0
      %v409 = vadd.f32 0.0, %v408
      %v410 = vpop.f32.mrf.mxu0
      %411 = vmatprep.mubr.bf16.mxu0 0
      %412 = vmatmul.mubr.bf16.gmra.mxu0 %v323
      %v413 = vpop.f32.mrf.mxu0
      %v414 = vadd.f32 0.0, %v413
      %v415 = vpop.f32.mrf.mxu0
      %v416 = vpop.f32.mrf.mxu0
      %v417 = vadd.f32 0.0, %v416
      %v418 = vpop.f32.mrf.mxu0
      %419 = vmatprep.mubr.bf16.mxu0 0
      %420 = vmatmul.mubr.bf16.gmra.mxu0 %v326
      %v421 = vpop.f32.mrf.mxu0
      %v422 = vadd.f32 0.0, %v421
      %v423 = vpop.f32.mrf.mxu0
      %v424 = vpop.f32.mrf.mxu0
      %v425 = vadd.f32 0.0, %v424
      %v426 = vpop.f32.mrf.mxu0
      %427 = vmatprep.mubr.bf16.mxu0 0
      %428 = vmatmul.mubr.bf16.gmra.mxu0 %v329
      %v429 = vpop.f32.mrf.mxu0
      %v430 = vadd.f32 0.0, %v429
      %v431 = vpop.f32.mrf.mxu0
      %v432 = vpop.f32.mrf.mxu0
      %v433 = vadd.f32 0.0, %v432
      %v434 = vpop.f32.mrf.mxu0
      %435 = vmatprep.mubr.bf16.mxu0 0
      %436 = vmatmul.mubr.bf16.gmra.mxu0 %v332
      %v437 = vpop.f32.mrf.mxu0
      %v438 = vadd.f32 0.0, %v437
      %v439 = vpop.f32.mrf.mxu0
      %v440 = vpop.f32.mrf.mxu0
      %v441 = vadd.f32 0.0, %v440
      %v442 = vpop.f32.mrf.mxu0
      %443 = vmatprep.mubr.bf16.mxu0 0
      %444 = vmatmul.mubr.bf16.gmra.mxu0 %v335
      %v445 = vpop.f32.mrf.mxu0
      %v446 = vadd.f32 0.0, %v445
      %v447 = vpop.f32.mrf.mxu0
      %v448 = vpop.f32.mrf.mxu0
      %v449 = vadd.f32 0.0, %v448
      %v450 = vpop.f32.mrf.mxu0
      %451 = vmatprep.mubr.bf16.mxu0 0
      %452 = vmatmul.mubr.bf16.gmra.mxu0 %v338
      %v453 = vpop.f32.mrf.mxu0
      %v454 = vadd.f32 0.0, %v453
      %v455 = vpop.f32.mrf.mxu0
      %v456 = vpop.f32.mrf.mxu0
      %v457 = vadd.f32 0.0, %v456
      %v458 = vpop.f32.mrf.mxu0
      %459 = vmatprep.mubr.bf16.mxu0 0
      %460 = vmatmul.mubr.bf16.gmra.mxu0 %v341
      %v461 = vpop.f32.mrf.mxu0
      %v462 = vadd.f32 0.0, %v461
      %v463 = vpop.f32.mrf.mxu0
      %v464 = vpop.f32.mrf.mxu0
      %v465 = vadd.f32 0.0, %v464
      %v466 = vpop.f32.mrf.mxu0
      %467 = vmatprep.mubr.bf16.mxu0 0
      %468 = vmatmul.mubr.bf16.gmra.mxu0 %v344
      %v469 = vpop.f32.mrf.mxu0
      %v470 = vadd.f32 0.0, %v469
      %v471 = vpop.f32.mrf.mxu0
      %v472 = vpop.f32.mrf.mxu0
      %v473 = vadd.f32 0.0, %v472
      %v474 = vpop.f32.mrf.mxu0
      %475 = vmatprep.mubr.bf16.mxu0 0
      %476 = vmatmul.mubr.bf16.gmra.mxu0 %v347
      %v477 = vpop.f32.mrf.mxu0
      %v478 = vadd.f32 0.0, %v477
      %v479 = vpop.f32.mrf.mxu0
      %v480 = vpop.f32.mrf.mxu0
      %v481 = vadd.f32 0.0, %v480
      %v482 = vpop.f32.mrf.mxu0
      %483 = vmatprep.mubr.bf16.mxu0 0
      %484 = vmatmul.mubr.bf16.gmra.mxu0 %v350
      %v485 = vpop.f32.mrf.mxu0
      %v486 = vadd.f32 0.0, %v485
      %v487 = vpop.f32.mrf.mxu0
      %v488 = vpop.f32.mrf.mxu0
      %v489 = vadd.f32 0.0, %v488
      %v490 = vpop.f32.mrf.mxu0
      %491 = vmatprep.mubr.bf16.mxu0 0
      %492 = vmatmul.mubr.bf16.gmra.mxu0 %v353
      %v493 = vpop.f32.mrf.mxu0
      %v494 = vadd.f32 0.0, %v493
      %v495 = vpop.f32.mrf.mxu0
      %v496 = vpop.f32.mrf.mxu0
      %v497 = vadd.f32 0.0, %v496
      %v498 = vpop.f32.mrf.mxu0
      %499 = vmatprep.mubr.bf16.mxu0 0
      %500 = vmatmul.mubr.bf16.gmra.mxu0 %v356
      %v501 = vpop.f32.mrf.mxu0
      %v502 = vadd.f32 0.0, %v501
      %v503 = vpop.f32.mrf.mxu0
      %v504 = vpop.f32.mrf.mxu0
      %v505 = vadd.f32 0.0, %v504
      %v506 = vpop.f32.mrf.mxu0
      %507 = vmatprep.mubr.bf16.mxu0 0
      %508 = vmatmul.mubr.bf16.gmra.mxu0 %v359
      %v509 = vpop.f32.mrf.mxu0
      %v510 = vadd.f32 0.0, %v509
      %v511 = vpop.f32.mrf.mxu0
      %v512 = vpop.f32.mrf.mxu0
      %v513 = vadd.f32 0.0, %v512
      %v514 = vpop.f32.mrf.mxu0
      %515 = vmatprep.mubr.bf16.mxu0 0
      %516 = vmatmul.mubr.bf16.gmra.mxu0 %v362
      %v517 = vpop.f32.mrf.mxu0
      %v518 = vadd.f32 0.0, %v517
      %v519 = vpop.f32.mrf.mxu0
      %v520 = vpop.f32.mrf.mxu0
      %v521 = vadd.f32 0.0, %v520
      %v522 = vpop.f32.mrf.mxu0
      %523 = vmatprep.mubr.bf16.mxu0 0
      %524 = vmatmul.mubr.bf16.gmra.mxu0 %v365
      %v525 = vpop.f32.mrf.mxu0
      %v526 = vadd.f32 0.0, %v525
      %v527 = vpop.f32.mrf.mxu0
      %v528 = vpop.f32.mrf.mxu0
      %v529 = vadd.f32 0.0, %v528
      %v530 = vpop.f32.mrf.mxu0
      %531 = vdwg.mxu0
      %vm532 = vcmask 31744
      %533 = vst.msk [vmem:[%s179] sm:$0xff] %vm532, %v406
      %534 = vst.msk [vmem:[%s179 + $0x8] sm:$0xff] %vm532, %v409
      %535 = vst.msk [vmem:[%s179 + $0x10] sm:$0xff] %vm532, %v414
      %536 = vst.msk [vmem:[%s179 + $0x18] sm:$0xff] %vm532, %v417
      %537 = vst.msk [vmem:[%s179 + $0x20] sm:$0xff] %vm532, %v422
      %538 = vst.msk [vmem:[%s179 + $0x28] sm:$0xff] %vm532, %v425
      %539 = vst.msk [vmem:[%s179 + $0x30] sm:$0xff] %vm532, %v430
      %540 = vst.msk [vmem:[%s179 + $0x38] sm:$0xff] %vm532, %v433
      %541 = vst.msk [vmem:[%s179 + $0x40] sm:$0xff] %vm532, %v438
      %542 = vst.msk [vmem:[%s179 + $0x48] sm:$0xff] %vm532, %v441
      %543 = vst.msk [vmem:[%s179 + $0x50] sm:$0xff] %vm532, %v446
      %544 = vst.msk [vmem:[%s179 + $0x58] sm:$0xff] %vm532, %v449
      %545 = vst.msk [vmem:[%s179 + $0x60] sm:$0xff] %vm532, %v454
      %546 = vst.msk [vmem:[%s179 + $0x68] sm:$0xff] %vm532, %v457
      %547 = vst.msk [vmem:[%s179 + $0x70] sm:$0xff] %vm532, %v462
      %548 = vst.msk [vmem:[%s179 + $0x78] sm:$0xff] %vm532, %v465
      %549 = vst.msk [vmem:[%s179 + $0x80] sm:$0xff] %vm532, %v470
      %550 = vst.msk [vmem:[%s179 + $0x88] sm:$0xff] %vm532, %v473
      %551 = vst.msk [vmem:[%s179 + $0x90] sm:$0xff] %vm532, %v478
      %552 = vst.msk [vmem:[%s179 + $0x98] sm:$0xff] %vm532, %v481
      %553 = vst.msk [vmem:[%s179 + $0xa0] sm:$0xff] %vm532, %v486
      %554 = vst.msk [vmem:[%s179 + $0xa8] sm:$0xff] %vm532, %v489
      %555 = vst.msk [vmem:[%s179 + $0xb0] sm:$0xff] %vm532, %v494
      %556 = vst.msk [vmem:[%s179 + $0xb8] sm:$0xff] %vm532, %v497
      %557 = vst.msk [vmem:[%s179 + $0xc0] sm:$0xff] %vm532, %v502
      %558 = vst.msk [vmem:[%s179 + $0xc8] sm:$0xff] %vm532, %v505
      %559 = vst.msk [vmem:[%s179 + $0xd0] sm:$0xff] %vm532, %v510
      %560 = vst.msk [vmem:[%s179 + $0xd8] sm:$0xff] %vm532, %v513
      %561 = vst.msk [vmem:[%s179 + $0xe0] sm:$0xff] %vm532, %v518
      %562 = vst.msk [vmem:[%s179 + $0xe8] sm:$0xff] %vm532, %v521
      %563 = vst.msk [vmem:[%s179 + $0xf0] sm:$0xff] %vm532, %v526
      %564 = vst.msk [vmem:[%s179 + $0xf8] sm:$0xff] %vm532, %v529
      %v565 = vsel %vm532, %v406, 0.0
      %v566 = vsel %vm532, %v409, 0.0
      %v567 = vadd.f32 %v565, %v566
      %v568 = vsel %vm532, %v414, 0.0
      %v569 = vadd.f32 %v567, %v568
      %v570 = vsel %vm532, %v417, 0.0
      %v571 = vadd.f32 %v569, %v570
      %v572 = vsel %vm532, %v422, 0.0
      %v573 = vadd.f32 %v571, %v572
      %v574 = vsel %vm532, %v425, 0.0
      %v575 = vadd.f32 %v573, %v574
      %v576 = vsel %vm532, %v430, 0.0
      %v577 = vadd.f32 %v575, %v576
      %v578 = vsel %vm532, %v433, 0.0
      %v579 = vadd.f32 %v577, %v578
      %v580 = vsel %vm532, %v438, 0.0
      %v581 = vadd.f32 %v579, %v580
      %v582 = vsel %vm532, %v441, 0.0
      %v583 = vadd.f32 %v581, %v582
      %v584 = vsel %vm532, %v446, 0.0
      %v585 = vadd.f32 %v583, %v584
      %v586 = vsel %vm532, %v449, 0.0
      %v587 = vadd.f32 %v585, %v586
      %v588 = vsel %vm532, %v454, 0.0
      %v589 = vadd.f32 %v587, %v588
      %v590 = vsel %vm532, %v457, 0.0
      %v591 = vadd.f32 %v589, %v590
      %v592 = vsel %vm532, %v462, 0.0
      %v593 = vadd.f32 %v591, %v592
      %v594 = vsel %vm532, %v465, 0.0
      %v595 = vadd.f32 %v593, %v594
      %v596 = vsel %vm532, %v470, 0.0
      %v597 = vadd.f32 %v595, %v596
      %v598 = vsel %vm532, %v473, 0.0
      %v599 = vadd.f32 %v597, %v598
      %v600 = vsel %vm532, %v478, 0.0
      %v601 = vadd.f32 %v599, %v600
      %v602 = vsel %vm532, %v481, 0.0
      %v603 = vadd.f32 %v601, %v602
      %v604 = vsel %vm532, %v486, 0.0
      %v605 = vadd.f32 %v603, %v604
      %v606 = vsel %vm532, %v489, 0.0
      %v607 = vadd.f32 %v605, %v606
      %v608 = vsel %vm532, %v494, 0.0
      %v609 = vadd.f32 %v607, %v608
      %v610 = vsel %vm532, %v497, 0.0
      %v611 = vadd.f32 %v609, %v610
      %v612 = vsel %vm532, %v502, 0.0
      %v613 = vadd.f32 %v611, %v612
      %v614 = vsel %vm532, %v505, 0.0
      %v615 = vadd.f32 %v613, %v614
      %v616 = vsel %vm532, %v510, 0.0
      %v617 = vadd.f32 %v615, %v616
      %v618 = vsel %vm532, %v513, 0.0
      %v619 = vadd.f32 %v617, %v618
      %v620 = vsel %vm532, %v518, 0.0
      %v621 = vadd.f32 %v619, %v620
      %v622 = vsel %vm532, %v521, 0.0
      %v623 = vadd.f32 %v621, %v622
      %v624 = vsel %vm532, %v526, 0.0
      %v625 = vadd.f32 %v623, %v624
      %v626 = vsel %vm532, %v529, 0.0
      %v627 = vadd.f32 %v625, %v626
      %v628 = vrot.slane %v627, 4
      %v629 = vadd.f32 %v627, %v628
      %v630 = vrot.slane %v629, 2
      %v631 = vadd.f32 %v629, %v630
      %v632 = vrot.slane %v631, 1
      %v633 = vadd.f32 %v631, %v632
      %vm634 = vcmask 24576
      %635 = vst.msk [vmem:[%s184] sm:$0x1] %vm634, %v633
      %v636 = vmul.f32 %v406, %v406
      %v637 = vmul.f32 %v409, %v409
      %v638 = vmul.f32 %v414, %v414
      %v639 = vmul.f32 %v417, %v417
      %v640 = vmul.f32 %v422, %v422
      %v641 = vmul.f32 %v425, %v425
      %v642 = vmul.f32 %v430, %v430
      %v643 = vmul.f32 %v433, %v433
      %v644 = vmul.f32 %v438, %v438
      %v645 = vmul.f32 %v441, %v441
      %v646 = vmul.f32 %v446, %v446
      %v647 = vmul.f32 %v449, %v449
      %v648 = vmul.f32 %v454, %v454
      %v649 = vmul.f32 %v457, %v457
      %v650 = vmul.f32 %v462, %v462
      %v651 = vmul.f32 %v465, %v465
      %v652 = vmul.f32 %v470, %v470
      %v653 = vmul.f32 %v473, %v473
      %v654 = vmul.f32 %v478, %v478
      %v655 = vmul.f32 %v481, %v481
      %v656 = vmul.f32 %v486, %v486
      %v657 = vmul.f32 %v489, %v489
      %v658 = vmul.f32 %v494, %v494
      %v659 = vmul.f32 %v497, %v497
      %v660 = vmul.f32 %v502, %v502
      %v661 = vmul.f32 %v505, %v505
      %v662 = vmul.f32 %v510, %v510
      %v663 = vmul.f32 %v513, %v513
      %v664 = vmul.f32 %v518, %v518
      %v665 = vmul.f32 %v521, %v521
      %v666 = vmul.f32 %v526, %v526
      %v667 = vmul.f32 %v529, %v529
      %v668 = vsel %vm532, %v636, 0.0
      %v669 = vsel %vm532, %v637, 0.0
      %v670 = vadd.f32 %v668, %v669
      %v671 = vsel %vm532, %v638, 0.0
      %v672 = vadd.f32 %v670, %v671
      %v673 = vsel %vm532, %v639, 0.0
      %v674 = vadd.f32 %v672, %v673
      %v675 = vsel %vm532, %v640, 0.0
      %v676 = vadd.f32 %v674, %v675
      %v677 = vsel %vm532, %v641, 0.0
      %v678 = vadd.f32 %v676, %v677
      %v679 = vsel %vm532, %v642, 0.0
      %v680 = vadd.f32 %v678, %v679
      %v681 = vsel %vm532, %v643, 0.0
      %v682 = vadd.f32 %v680, %v681
      %v683 = vsel %vm532, %v644, 0.0
      %v684 = vadd.f32 %v682, %v683
      %v685 = vsel %vm532, %v645, 0.0
      %v686 = vadd.f32 %v684, %v685
      %v687 = vsel %vm532, %v646, 0.0
      %v688 = vadd.f32 %v686, %v687
      %v689 = vsel %vm532, %v647, 0.0
      %v690 = vadd.f32 %v688, %v689
      %v691 = vsel %vm532, %v648, 0.0
      %v692 = vadd.f32 %v690, %v691
      %v693 = vsel %vm532, %v649, 0.0
      %v694 = vadd.f32 %v692, %v693
      %v695 = vsel %vm532, %v650, 0.0
      %v696 = vadd.f32 %v694, %v695
      %v697 = vsel %vm532, %v651, 0.0
      %v698 = vadd.f32 %v696, %v697
      %v699 = vsel %vm532, %v652, 0.0
      %v700 = vadd.f32 %v698, %v699
      %v701 = vsel %vm532, %v653, 0.0
      %v702 = vadd.f32 %v700, %v701
      %v703 = vsel %vm532, %v654, 0.0
      %v704 = vadd.f32 %v702, %v703
      %v705 = vsel %vm532, %v655, 0.0
      %v706 = vadd.f32 %v704, %v705
      %v707 = vsel %vm532, %v656, 0.0
      %v708 = vadd.f32 %v706, %v707
      %v709 = vsel %vm532, %v657, 0.0
      %v710 = vadd.f32 %v708, %v709
      %v711 = vsel %vm532, %v658, 0.0
      %v712 = vadd.f32 %v710, %v711
      %v713 = vsel %vm532, %v659, 0.0
      %v714 = vadd.f32 %v712, %v713
      %v715 = vsel %vm532, %v660, 0.0
      %v716 = vadd.f32 %v714, %v715
      %v717 = vsel %vm532, %v661, 0.0
      %v718 = vadd.f32 %v716, %v717
      %v719 = vsel %vm532, %v662, 0.0
      %v720 = vadd.f32 %v718, %v719
      %v721 = vsel %vm532, %v663, 0.0
      %v722 = vadd.f32 %v720, %v721
      %v723 = vsel %vm532, %v664, 0.0
      %v724 = vadd.f32 %v722, %v723
      %v725 = vsel %vm532, %v665, 0.0
      %v726 = vadd.f32 %v724, %v725
      %v727 = vsel %vm532, %v666, 0.0
      %v728 = vadd.f32 %v726, %v727
      %v729 = vsel %vm532, %v667, 0.0
      %v730 = vadd.f32 %v728, %v729
      %v731 = vrot.slane %v730, 4
      %v732 = vadd.f32 %v730, %v731
      %v733 = vrot.slane %v732, 2
      %v734 = vadd.f32 %v732, %v733
      %v735 = vrot.slane %v734, 1
      %v736 = vadd.f32 %v734, %v735
      %737 = vst.msk [vmem:[%s184 + $0x1] sm:$0x1] %vm634, %v736
      %s738 = smul.u32 32, %s15
      %p739 = scmp.lt.s32.totalorder %s738, 63
      %s740 = scalar_select %p739, %s738, 63
      %s741 = smul.addr %s740, 8
      %s742 = scalar_lea.vmem %s2, %s741
      %p743 = scmp.lt.s32.totalorder %s15, 1
      %s744 = scalar_select %p743, %s15, 1
      %s745 = smul.addr %s744, 2
      %s746 = scalar_lea.vmem %s3, %s745
      // Predicated region
      $region29: #{basic_block_forward.4} parent=27 // pred_check
        %p747 = pneg %p80
      $region30: #{basic_block_forward.4} parent=27 // pred_check_branch
        %749 = sbr.rel (%p747) target = $region32
      $region31: #{basic_block_forward.4} parent=27 // pred_region
        %s750 = smul.u32 32, %s15
      $region32: #{basic_block_forward.4} parent=27 // pred_fallthru
        _
      // Predicated region
      $region33: #{basic_block_forward.4} parent=27 // pred_check
        %p751 = pneg %p106
      $region34: #{basic_block_forward.4} parent=27 // pred_check_branch
        %753 = sbr.rel (%p751) target = $region36
      $region35: #{basic_block_forward.4} parent=27 // pred_region
        _
      $region36: #{basic_block_forward.4} parent=27 // pred_fallthru
        _
    $region28: #{basic_block_forward.4} parent=5 // pred_fallthru
      _
    %p754 = scmp.le.s32.totalorder 2, %s10
    // Predicated region
    $region37: #{basic_block_forward.4} parent=5 // pred_check
      %p755 = pneg %p754
    $region38: #{basic_block_forward.4} parent=5 // pred_check_branch
      %757 = sbr.rel (%p755) target = $region40
    $region39: #{basic_block_forward.4} parent=5 // pred_region
      %s758 = ssub.s32 %s10, 2
      // Predicated region
      $region41: #{basic_block_forward.4} parent=39 // pred_check
        %p759 = pneg %p86
      $region42: #{basic_block_forward.4} parent=39 // pred_check_branch
        %761 = sbr.rel (%p759) target = $region44
      $region43: #{basic_block_forward.4} parent=39 // pred_region
        %s762 = smul.u32 32, %s16
        %p763 = scmp.lt.s32.totalorder %s762, 63
        %s764 = scalar_select %p763, %s762, 63
        %s765 = smul.addr %s764, 8
        %s766 = scalar_lea.vmem %s2, %s765
      $region44: #{basic_block_forward.4} parent=39 // pred_fallthru
        _
      // Predicated region
      $region45: #{basic_block_forward.4} parent=39 // pred_check
        %p767 = pneg %p112
      $region46: #{basic_block_forward.4} parent=39 // pred_check_branch
        %769 = sbr.rel (%p767) target = $region48
      $region47: #{basic_block_forward.4} parent=39 // pred_region
        %p770 = scmp.lt.s32.totalorder %s16, 1
        %s771 = scalar_select %p770, %s16, 1
        %s772 = smul.addr %s771, 2
        %s773 = scalar_lea.vmem %s3, %s772
      $region48: #{basic_block_forward.4} parent=39 // pred_fallthru
        _
    $region40: #{basic_block_forward.4} parent=5 // pred_fallthru
      _
  $region6: #{basic_block_forward.4} parent=0 // loop_footer
    %s14 = sadd.s32 1, %s10
  $region7: #{basic_block_forward.4} parent=0 // loop_footer_branch
    %9 = sbr.rel target = $region3
  $region8: #{basic_block_forward.4} parent=0 // loop_exit
    _

// kernel: basic_block_forward.5
$region0: #{basic_block_forward.5}
  #allocation0 [shape = 'u32[]', space=smem, size = 0x4, offset = 0x4, fixed_abs, tag = 'smem constant byte address 0x4 - core index']
  #allocation1 [shape = 'u32[144,128]{1,0:T(1,128)}', space=vmem, size = 0x12000, scoped, tag = 'internal scratch']
  %s0 = inlined_call_operand.vmem [shape: f32[16,128], index: 0, kind: input, shape index: {}]
  %s1 = inlined_call_operand.vmem [shape: f32[1,128], index: 1, kind: input, shape index: {}]
  %s2 = inlined_call_operand.vmem [shape: f32[1,128], index: 2, kind: input, shape index: {}]
  %s3 = inlined_call_operand.vmem [shape: bf16[16,128], index: 3, kind: output, shape index: {}]
  %s4 = sld [smem:[#allocation0]]
  $region22: #{basic_block_forward.5} parent=0
    _
  %s6 = ssub.s32 1, %s4
  %s7 = scalar_select 0, %s6, %s4
  // Predicated region
  $region2: #{basic_block_forward.5} parent=0 // pred_check
    _
  $region3: #{basic_block_forward.5} parent=0 // pred_check_branch
    %9 = sbr.rel (0) target = $region5
  $region4: #{basic_block_forward.5} parent=0 // pred_region
    _
  $region5: #{basic_block_forward.5} parent=0 // pred_fallthru
    _
  // Predicated region
  $region6: #{basic_block_forward.5} parent=0 // pred_check
    _
  $region7: #{basic_block_forward.5} parent=0 // pred_check_branch
    %11 = sbr.rel (0) target = $region9
  $region8: #{basic_block_forward.5} parent=0 // pred_region
    _
  $region9: #{basic_block_forward.5} parent=0 // pred_fallthru
    _
  // Predicated region
  $region10: #{basic_block_forward.5} parent=0 // pred_check
    _
  $region11: #{basic_block_forward.5} parent=0 // pred_check_branch
    %13 = sbr.rel (0) target = $region13
  $region12: #{basic_block_forward.5} parent=0 // pred_region
    _
  $region13: #{basic_block_forward.5} parent=0 // pred_fallthru
    _
  %v14 = vld [vmem:[%s0] sm:$0xff]
  %v15 = vld [vmem:[%s0 + $0x8] sm:$0xff]
  %v16 = vld [vmem:[%s1] sm:$0x1]
  %v18 = vlaneseq
  %v19 = vshrl.u32 %v18, 7
  %v20 = vsub.s32 0, %v19
  %v21 = vrot.slane %v16, %v20
  %v23 = vmul.f32 %v14, %v21
  %v24 = vmul.f32 %v15, %v21
  %v25 = vld [vmem:[%s2] sm:$0x1]
  %v27 = vlaneseq
  %v28 = vshrl.u32 %v27, 7
  %v29 = vsub.s32 0, %v28
  %v30 = vrot.slane %v25, %v29
  %v32 = vadd.f32 %v23, %v30
  %v33 = vadd.f32 %v24, %v30
  %v34 = vmax.f32 %v32, 0.0
  %v35 = vmax.f32 %v33, 0.0
  %v36 = vpack.c.bf16 %v35, %v34
  %v38 = vunpack.c.l.b16 %v36
  %v39 = vunpack.c.h.b16 %v36
  %v40 = vpack.c.b16 %v38, %v38
  %v41 = vpack.c.b16 %v39, %v39
  %44 = vst [vmem:[%s3] sm:$0xf] %v40
  %45 = vst [vmem:[%s3 + $0x4] sm:$0xf] %v41
  // Predicated region
  $region14: #{basic_block_forward.5} parent=0 // pred_check
    _
  $region15: #{basic_block_forward.5} parent=0 // pred_check_branch
    %47 = sbr.rel (0) target = $region17
  $region16: #{basic_block_forward.5} parent=0 // pred_region
    _
  $region17: #{basic_block_forward.5} parent=0 // pred_fallthru
    _
  // Predicated region
  $region18: #{basic_block_forward.5} parent=0 // pred_check
    _
  $region19: #{basic_block_forward.5} parent=0 // pred_check_branch
    %49 = sbr.rel (0) target = $region21
  $region20: #{basic_block_forward.5} parent=0 // pred_region
    _
  $region21: #{basic_block_forward.5} parent=0 // pred_fallthru
    _

// kernel: tile.18
$region0: #{tile.18}
  #allocation0 [shape = 's32[1]{0}', space=sflag, size = 0x4, scoped, tag = 'scoped memory for tile.18']
  %s0 = inlined_call_operand.<no memory space> [shape: f32[], index: 0, kind: input, shape index: {}]
  %s1 = inlined_call_operand.vmem [shape: f32[1,128], index: 1, kind: output, shape index: {}]
  %v2 = vstv %s0
  %3 = vst [vmem:[%s1] sm:$0x1] %v2

// kernel: basic_block_forward.7
$region0: #{basic_block_forward.7}
  #allocation0 [shape = 'u32[]', space=smem, size = 0x4, offset = 0x4, fixed_abs, tag = 'smem constant byte address 0x4 - core index']
  #allocation1 [shape = 'u32[144,128]{1,0:T(1,128)}', space=vmem, size = 0x12000, scoped, tag = 'internal scratch']
  %s0 = inlined_call_operand.vmem [shape: f32[16,128], index: 0, kind: input, shape index: {}]
  %s1 = inlined_call_operand.vmem [shape: f32[1,128], index: 1, kind: input, shape index: {}]
  %s2 = inlined_call_operand.vmem [shape: f32[1,128], index: 2, kind: input, shape index: {}]
  %s3 = inlined_call_operand.vmem [shape: f32[16,128], index: 3, kind: input, shape index: {}]
  %s4 = inlined_call_operand.vmem [shape: f32[1,128], index: 4, kind: input, shape index: {}]
  %s5 = inlined_call_operand.vmem [shape: f32[1,128], index: 5, kind: input, shape index: {}]
  %s6 = inlined_call_operand.vmem [shape: f32[16,128], index: 6, kind: output, shape index: {}]
  %s7 = sld [smem:[#allocation0]]
  $region34: #{basic_block_forward.7} parent=0
    _
  %s9 = ssub.s32 1, %s7
  %s10 = scalar_select 0, %s9, %s7
  // Predicated region
  $region2: #{basic_block_forward.7} parent=0 // pred_check
    _
  $region3: #{basic_block_forward.7} parent=0 // pred_check_branch
    %12 = sbr.rel (0) target = $region5
  $region4: #{basic_block_forward.7} parent=0 // pred_region
    _
  $region5: #{basic_block_forward.7} parent=0 // pred_fallthru
    _
  // Predicated region
  $region6: #{basic_block_forward.7} parent=0 // pred_check
    _
  $region7: #{basic_block_forward.7} parent=0 // pred_check_branch
    %14 = sbr.rel (0) target = $region9
  $region8: #{basic_block_forward.7} parent=0 // pred_region
    _
  $region9: #{basic_block_forward.7} parent=0 // pred_fallthru
    _
  // Predicated region
  $region10: #{basic_block_forward.7} parent=0 // pred_check
    _
  $region11: #{basic_block_forward.7} parent=0 // pred_check_branch
    %16 = sbr.rel (0) target = $region13
  $region12: #{basic_block_forward.7} parent=0 // pred_region
    _
  $region13: #{basic_block_forward.7} parent=0 // pred_fallthru
    _
  // Predicated region
  $region14: #{basic_block_forward.7} parent=0 // pred_check
    _
  $region15: #{basic_block_forward.7} parent=0 // pred_check_branch
    %18 = sbr.rel (0) target = $region17
  $region16: #{basic_block_forward.7} parent=0 // pred_region
    _
  $region17: #{basic_block_forward.7} parent=0 // pred_fallthru
    _
  // Predicated region
  $region18: #{basic_block_forward.7} parent=0 // pred_check
    _
  $region19: #{basic_block_forward.7} parent=0 // pred_check_branch
    %20 = sbr.rel (0) target = $region21
  $region20: #{basic_block_forward.7} parent=0 // pred_region
    _
  $region21: #{basic_block_forward.7} parent=0 // pred_fallthru
    _
  // Predicated region
  $region22: #{basic_block_forward.7} parent=0 // pred_check
    _
  $region23: #{basic_block_forward.7} parent=0 // pred_check_branch
    %22 = sbr.rel (0) target = $region25
  $region24: #{basic_block_forward.7} parent=0 // pred_region
    _
  $region25: #{basic_block_forward.7} parent=0 // pred_fallthru
    _
  %v23 = vld [vmem:[%s0] sm:$0xff]
  %v24 = vld [vmem:[%s0 + $0x8] sm:$0xff]
  %v25 = vld [vmem:[%s1] sm:$0x1]
  %v27 = vlaneseq
  %v28 = vshrl.u32 %v27, 7
  %v29 = vsub.s32 0, %v28
  %v30 = vrot.slane %v25, %v29
  %v32 = vmul.f32 %v23, %v30
  %v33 = vmul.f32 %v24, %v30
  %v34 = vld [vmem:[%s2] sm:$0x1]
  %v36 = vlaneseq
  %v37 = vshrl.u32 %v36, 7
  %v38 = vsub.s32 0, %v37
  %v39 = vrot.slane %v34, %v38
  %v41 = vadd.f32 %v32, %v39
  %v42 = vadd.f32 %v33, %v39
  %v43 = vld [vmem:[%s3] sm:$0xff]
  %v44 = vld [vmem:[%s3 + $0x8] sm:$0xff]
  %v45 = vld [vmem:[%s4] sm:$0x1]
  %v47 = vlaneseq
  %v48 = vshrl.u32 %v47, 7
  %v49 = vsub.s32 0, %v48
  %v50 = vrot.slane %v45, %v49
  %v52 = vmul.f32 %v43, %v50
  %v53 = vmul.f32 %v44, %v50
  %v54 = vld [vmem:[%s5] sm:$0x1]
  %v56 = vlaneseq
  %v57 = vshrl.u32 %v56, 7
  %v58 = vsub.s32 0, %v57
  %v59 = vrot.slane %v54, %v58
  %v61 = vadd.f32 %v52, %v59
  %v62 = vadd.f32 %v53, %v59
  %v63 = vadd.f32 %v41, %v61
  %v64 = vadd.f32 %v42, %v62
  %v65 = vmax.f32 %v63, 0.0
  %v66 = vmax.f32 %v64, 0.0
  %67 = vst [vmem:[%s6] sm:$0xff] %v65
  %68 = vst [vmem:[%s6 + $0x8] sm:$0xff] %v66
  // Predicated region
  $region26: #{basic_block_forward.7} parent=0 // pred_check
    _
  $region27: #{basic_block_forward.7} parent=0 // pred_check_branch
    %70 = sbr.rel (0) target = $region29
  $region28: #{basic_block_forward.7} parent=0 // pred_region
    _
  $region29: #{basic_block_forward.7} parent=0 // pred_fallthru
    _
  // Predicated region
  $region30: #{basic_block_forward.7} parent=0 // pred_check
    _
  $region31: #{basic_block_forward.7} parent=0 // pred_check_branch
    %72 = sbr.rel (0) target = $region33
  $region32: #{basic_block_forward.7} parent=0 // pred_region
    _
  $region33: #{basic_block_forward.7} parent=0 // pred_fallthru
    _

</llo_original>
